<compile_context>
chip_gen: v7x
topology: tpu7x:2x2x1
jax: 0.10.0
libtpu: 0.0.40
codegen_flags: <defaults>
</compile_context>

<pallas_src>
import jax
import jax.numpy as jnp
from jax import lax
from jax.experimental import pallas as pl
from jax.experimental.pallas import tpu as pltpu


_ONE_HOT_MAX_V = 2048      # one-hot MXU gather up to this vocab size
_N_INFLIGHT = 16           # outstanding row DMAs on the HBM path (power of 2)
_UNROLL = 8                # manual unroll factor for in-kernel row loops


def _round_up(x, m):
    return (x + m - 1) // m * m


# ----------------------- resident table: one-hot MXU path --------------------

def _embed_onehot_kernel(idx_ref, table_ref, out_ref):
    """Gather a (T, D) tile from a VMEM-resident table via one-hot MXU matmul."""
    idx = idx_ref[...]                                     # (T, 1) int32
    t_tile = out_ref.shape[0]
    v_total = table_ref.shape[0]
    iota = lax.broadcasted_iota(jnp.int32, (t_tile, v_total), 1)
    onehot = (idx == iota).astype(table_ref.dtype)
    out_ref[...] = jnp.dot(
        onehot,
        table_ref[...],
        preferred_element_type=jnp.float32,
        precision=lax.Precision.HIGHEST,                   # exact row gather
    ).astype(out_ref.dtype)


def _embedding_lookup_onehot(flat_idx_pad, table, *, t_tile, vmem_limit):
    n_pad = flat_idx_pad.shape[0]
    v, d = table.shape
    grid_spec = pltpu.PrefetchScalarGridSpec(
        num_scalar_prefetch=0,
        grid=(n_pad // t_tile,),
        in_specs=[
            pl.BlockSpec((t_tile, 1), lambda i: (i, 0)),            # idx tile
            pl.BlockSpec(memory_space=pltpu.MemorySpace.VMEM),      # table: 1 copy
        ],
        out_specs=pl.BlockSpec((t_tile, d), lambda i: (i, 0)),
    )
    return pl.pallas_call(
        _embed_onehot_kernel,
        out_shape=jax.ShapeDtypeStruct((n_pad, d), table.dtype),
        grid_spec=grid_spec,
        compiler_params=pltpu.CompilerParams(
            dimension_semantics=("parallel",),
            vmem_limit_bytes=vmem_limit,
        ),
    )(flat_idx_pad.reshape(n_pad, 1), table)


# ------------------- resident table: per-row gather path ---------------------

def _embed_gather_kernel(idx_ref, table_ref, out_ref):
    """Gather a (T, D) tile by dynamic sublane row copies from a VMEM table."""
    t_tile = out_ref.shape[0]
    base = pl.program_id(0) * t_tile

    def body(tb, carry):
        t0 = pl.multiple_of(tb * _UNROLL, _UNROLL)
        for u in range(_UNROLL):                           # manual 8x unroll
            t = t0 + u
            row = idx_ref[base + t]
            out_ref[pl.ds(t, 1), :] = table_ref[pl.ds(row, 1), :]
        return carry

    lax.fori_loop(0, t_tile // _UNROLL, body, 0)


def _embedding_lookup_resident_gather(flat_idx_pad, table, *, t_tile, vmem_limit):
    n_pad = flat_idx_pad.shape[0]
    _, d = table.shape
    grid_spec = pltpu.PrefetchScalarGridSpec(
        num_scalar_prefetch=1,                             # token ids -> SMEM
        grid=(n_pad // t_tile,),
        in_specs=[pl.BlockSpec(memory_space=pltpu.MemorySpace.VMEM)],  # table: 1 copy
        out_specs=pl.BlockSpec((t_tile, d), lambda i, idx: (i, 0)),
    )
    return pl.pallas_call(
        _embed_gather_kernel,
        out_shape=jax.ShapeDtypeStruct((n_pad, d), table.dtype),
        grid_spec=grid_spec,
        compiler_params=pltpu.CompilerParams(
            dimension_semantics=("parallel",),
            vmem_limit_bytes=vmem_limit,
        ),
    )(flat_idx_pad, table)


# ------------------------------ HBM table path -------------------------------

def _embed_hbm_kernel(idx_ref, table_hbm, out_ref, sems):
    """Gather (T, D) with up to _N_INFLIGHT row DMAs landing directly in out_ref."""
    t_tile = out_ref.shape[0]
    base = pl.program_id(0) * t_tile
    mask = _N_INFLIGHT - 1

    def issue(t):
        row = idx_ref[base + t]
        pltpu.make_async_copy(
            table_hbm.at[pl.ds(row, 1), :],
            out_ref.at[pl.ds(t, 1), :],
            sems.at[t & mask],
        ).start()

    def wait_slot(slot):
        # Same (1, D) slice shape/dtype as the issuing copy so the semaphore
        # byte count matches exactly.
        pltpu.make_async_copy(
            table_hbm.at[pl.ds(0, 1), :],
            out_ref.at[pl.ds(0, 1), :],
            sems.at[slot],
        ).wait()

    n_prime = min(_N_INFLIGHT, t_tile)

    # Prime: static unroll (n_prime is a Python int).
    for t in range(n_prime):
        issue(t)

    # Steady state: wait oldest slot, reuse it for the next row (8x unrolled).
    if t_tile > _N_INFLIGHT:
        n_steady = t_tile - _N_INFLIGHT                    # multiple of 8

        def steady(tb, carry):
            t0 = pl.multiple_of(_N_INFLIGHT + tb * _UNROLL, _UNROLL)
            for u in range(_UNROLL):
                t = t0 + u
                wait_slot(t & mask)
                issue(t)
            return carry

        lax.fori_loop(0, n_steady // _UNROLL, steady, 0)

    # Drain remaining in-flight copies (static unroll).
    for k in range(n_prime):
        t = t_tile - n_prime + k
        wait_slot(t & mask)


def _embedding_lookup_hbm(flat_idx_pad, table, *, t_tile, vmem_limit):
    n_pad = flat_idx_pad.shape[0]
    _, d = table.shape
    # TODO(synk): for very large B*S, switch the indices to a per-tile SMEM
    # BlockSpec instead of scalar-prefetching the whole flat index array.
    grid_spec = pltpu.PrefetchScalarGridSpec(
        num_scalar_prefetch=1,                             # token ids -> SMEM
        grid=(n_pad // t_tile,),
        in_specs=[pl.BlockSpec(memory_space=pl.ANY)],      # table stays in HBM
        out_specs=pl.BlockSpec((t_tile, d), lambda i, idx: (i, 0)),
        scratch_shapes=[pltpu.SemaphoreType.DMA((_N_INFLIGHT,))],
    )
    return pl.pallas_call(
        _embed_hbm_kernel,
        out_shape=jax.ShapeDtypeStruct((n_pad, d), table.dtype),
        grid_spec=grid_spec,
        compiler_params=pltpu.CompilerParams(
            dimension_semantics=("parallel",),
            vmem_limit_bytes=vmem_limit,
        ),
    )(flat_idx_pad, table)


# --------------------------------- wrapper ------------------------------------

def embedding_lookup(indices, table, *, force_hbm_path=False,
                     one_hot_max_v=_ONE_HOT_MAX_V):
    """indices: (B, S) int; table: (V, D) -> (B, S, D) (== nn.Embedding(x))."""
    b, s = indices.shape
    v, d = table.shape
    n_tok = b * s
    itemsize = jnp.dtype(table.dtype).itemsize

    # torch nn.Embedding errors on OOB ids; here we clamp (no in-kernel check).
    flat_idx = jnp.clip(indices.reshape(-1).astype(jnp.int32), 0, v - 1)

    # Lane-dense output: pad D to a multiple of 128 (sliced off at the end).
    d_pad = _round_up(d, 128)
    tab = table if d_pad == d else jnp.pad(table, ((0, 0), (0, d_pad - d)))
    table_bytes = v * d_pad * itemsize

    try:
        vmem_cap = int(pltpu.get_tpu_info().vmem_capacity_bytes)
    except Exception:
        vmem_cap = 64 << 20   # conservative fallback (v7x-sized)

    use_onehot = (not force_hbm_path) and v <= one_hot_max_v

    # Token-tile size: big tiles amortize the ~0.35us/step pipeline overhead.
    # On the one-hot path cap the (T, V) one-hot intermediate at ~2 MiB.
    if use_onehot:
        cap = max(8, min(1024, ((2 << 20) // max(v * 4, 1)) // 8 * 8))
    else:
        cap = 1024
    t_tile = max(8, min(cap, _round_up(max(n_tok, 1), 8)))
    n_pad = _round_up(n_tok, t_tile)
    if n_pad != n_tok:
        flat_idx = jnp.pad(flat_idx, (0, n_pad - n_tok))
    tile_bytes = t_tile * d_pad * itemsize

    # Residency gate: single-buffered table (memory_space=VMEM, one copy) +
    # double-buffered (T, D) output + one-hot temporaries + headroom.
    onehot_tmp = 3 * t_tile * v * 4 if use_onehot else 0
    need = table_bytes + 2 * tile_bytes + onehot_tmp + (8 << 20)
    resident = (not force_hbm_path) and need <= int(vmem_cap * 0.9)

    if resident:
        vmem_limit = int(min(max(need + (8 << 20), 32 << 20), vmem_cap - (2 << 20)))
        if use_onehot:
            out_flat = _embedding_lookup_onehot(
                flat_idx, tab, t_tile=t_tile, vmem_limit=vmem_limit)
        else:
            out_flat = _embedding_lookup_resident_gather(
                flat_idx, tab, t_tile=t_tile, vmem_limit=vmem_limit)
    else:
        # TODO(synk): v7x-only cliff for ~55-110 MiB tables: add a D-split grid
        # axis (table blocks (V, D/k) marked "parallel") or a bf16 resident copy
        # to keep them on the VMEM path instead of per-row HBM DMAs.
        need_hbm = 2 * tile_bytes + (16 << 20)
        vmem_limit = int(min(max(need_hbm, 32 << 20), vmem_cap - (2 << 20)))
        out_flat = _embedding_lookup_hbm(
            flat_idx, tab, t_tile=t_tile, vmem_limit=vmem_limit)

    out = out_flat[:n_tok]
    if d_pad != d:
        out = out[:, :d]
    return out.reshape(b, s, d)


if __name__ == "__main__":
    num_embeddings = 64
    embedding_dim = 128
    B, S = 2, 8

    key = jax.random.PRNGKey(0)
    k_table, k_idx, k_t2, k_i2 = jax.random.split(key, 4)

    # Deterministic synthetic parameters (nn.Embedding weight ~ N(0, 1)).
    table = jax.random.normal(
        k_table, (num_embeddings, embedding_dim), dtype=jnp.float32)
    x = jax.random.randint(k_idx, (B, S), 0, num_embeddings, dtype=jnp.int32)
    ref = table[x]

    # 1) Default path: VMEM-resident table, one-hot MXU gather.
    out = jax.block_until_ready(embedding_lookup(x, table))
    assert out.shape == (B, S, embedding_dim)
    assert jnp.allclose(out, ref), "one-hot resident path mismatch"

    # 2) Large-vocab resident path (forced at small shapes): per-row gather
    #    from the VMEM-resident table.
    out_g = jax.block_until_ready(embedding_lookup(x, table, one_hot_max_v=0))
    assert jnp.allclose(out_g, ref), "resident gather path mismatch"

    # 3) Huge-table path (forced at small shapes): HBM table, row DMAs landing
    #    directly in the output block.
    out_h = jax.block_until_ready(embedding_lookup(x, table, force_hbm_path=True))
    assert jnp.allclose(out_h, ref), "HBM DMA-gather path mismatch"

    # 4) Non-128-multiple embedding_dim exercises wrapper-side D padding.
    table96 = jax.random.normal(k_t2, (40, 96), dtype=jnp.float32)
    x2 = jax.random.randint(k_i2, (B, S), 0, 40, dtype=jnp.int32)
    out96 = jax.block_until_ready(embedding_lookup(x2, table96))
    assert out96.shape == (B, S, 96)
    assert jnp.allclose(out96, table96[x2]), "D-padded path mismatch"

    print("KERNEL_OK")
</pallas_src>

<mosaic_0001>
module attributes {stable_mosaic.version = 11 : i64} {
  func.func @_embed_onehot_kernel(%arg0: i32, %arg1: memref<16x1xi32, #tpu.memory_space<vmem>>, %arg2: memref<64x128xf32, #tpu.memory_space<vmem>>, %arg3: memref<16x128xf32, #tpu.memory_space<vmem>>) attributes {dimension_semantics = [#tpu.dimension_semantics<parallel>], iteration_bounds = array<i64: 1>, scalar_prefetch = 0 : i64, scratch_operands = 0 : i64, tpu.core_type = #tpu.core_type<tc>, window_params = [{transform_indices = @transform_0, window_bounds = array<i64: 16, 1>}, {pipeline_mode = #tpu.pipeline_mode<synchronous>, transform_indices = @transform_1, window_bounds = array<i64: 64, 128>}, {transform_indices = @transform_2, window_bounds = array<i64: 16, 128>}]} {
    %c0 = arith.constant 0 : index
    %c0_0 = arith.constant 0 : index
    %0 = vector.load %arg1[%c0, %c0_0] : memref<16x1xi32, #tpu.memory_space<vmem>>, vector<16x1xi32>
    %1 = tpu.iota {dimensions = array<i32: 1>} : vector<16x64xi32>
    %2 = vector.broadcast %0 : vector<16x1xi32> to vector<16x64xi32>
    %3 = arith.cmpi eq, %2, %1 : vector<16x64xi32>
    %4 = arith.extui %3 : vector<16x64xi1> to vector<16x64xi32>
    %5 = arith.sitofp %4 : vector<16x64xi32> to vector<16x64xf32>
    %c0_1 = arith.constant 0 : index
    %c0_2 = arith.constant 0 : index
    %6 = vector.load %arg2[%c0_1, %c0_2] : memref<64x128xf32, #tpu.memory_space<vmem>>, vector<64x128xf32>
    %cst = arith.constant dense<0.000000e+00> : vector<16x128xf32>
    %7 = tpu.matmul %5, %6, %cst {dimension_numbers = #tpu.dot_dimension_numbers<[1], [0], [0], [1], [0, 0, 1, 1], [], []>, precision = #tpu.contract_precision<fp32>} : vector<16x64xf32>, vector<64x128xf32>, vector<16x128xf32> -> vector<16x128xf32>
    %c0_3 = arith.constant 0 : index
    %c0_4 = arith.constant 0 : index
    %8 = vector.load %arg3[%c0_3, %c0_4] : memref<16x128xf32, #tpu.memory_space<vmem>>, vector<16x128xf32>
    tpu.vector_store %arg3[%c0_3, %c0_4], %7 {strides = array<i32>} : memref<16x128xf32, #tpu.memory_space<vmem>>, vector<16x128xf32>,
    return
  }
  func.func @transform_0(%arg0: i32) -> (i32, i32) {
    %c0_i32 = arith.constant 0 : i32
    %c0_i32_0 = arith.constant 0 : i32
    return %arg0, %c0_i32 : i32, i32
  }
  func.func @transform_1(%arg0: i32) -> (i32, i32) {
    %c0_i32 = arith.constant 0 : i32
    %c0_i32_0 = arith.constant 0 : i32
    %c0_i32_1 = arith.constant 0 : i32
    return %c0_i32, %c0_i32_0 : i32, i32
  }
  func.func @transform_2(%arg0: i32) -> (i32, i32) {
    %c0_i32 = arith.constant 0 : i32
    %c0_i32_0 = arith.constant 0 : i32
    return %arg0, %c0_i32 : i32, i32
  }
}

</mosaic_0001>

<llo_original>
// kernel: tpu_custom_call.1
$region0: #{tpu_custom_call.1}
  #allocation0 [shape = 'u32[]', space=smem, size = 0x4, offset = 0x4, fixed_abs, tag = 'smem constant byte address 0x4 - core index']
  #allocation1 [shape = 'u32[144,128]{1,0:T(1,128)}', space=vmem, size = 0x12000, scoped, tag = 'internal scratch']
  %s0 = inlined_call_operand.vmem [shape: s32[16,1], index: 0, kind: input, shape index: {}]
  %s1 = inlined_call_operand.hbm [shape: f32[64,128], index: 1, kind: input, shape index: {}]
  %s2 = inlined_call_operand.hbm [shape: f32[16,128], index: 2, kind: output, shape index: {}]
  %s3 = sld [smem:[#allocation0]]
  $region22: #{tpu_custom_call.1} parent=0
    _
  %s5 = ssub.s32 1, %s3
  %s6 = scalar_select 0, %s5, %s3
  $region1: #{tpu_custom_call.1} parent=0
    #allocation2 [shape = 'u8[32768]{0}', space=vmem, size = 0x8000, scoped, tag = 'input window, operand 1, single buffered']
    #allocation3 [shape = 's32[1]{0}', space=sflag, size = 0x4, scoped, tag = 'scoped memory for tpu_custom_call.1']
    #allocation4 [shape = 's32[1]{0}', space=sflag, size = 0x4, scoped, tag = 'scoped memory for tpu_custom_call.1']
    #allocation5 [shape = 'u8[8192]{0}', space=vmem, size = 0x2000, scoped, tag = 'output window, operand 0, single buffered']
    %7 = vsyncpa [#allocation3], 0
    %8 = vsyncpa [#allocation4], 0
    // Predicated region
    $region2: #{tpu_custom_call.1} parent=1 // pred_check
      _
    $region3: #{tpu_custom_call.1} parent=1 // pred_check_branch
      %10 = sbr.rel (0) target = $region5
    $region4: #{tpu_custom_call.1} parent=1 // pred_region
      _
    $region5: #{tpu_custom_call.1} parent=1 // pred_fallthru
      _
    // Predicated region
    $region6: #{tpu_custom_call.1} parent=1 // pred_check
      _
    $region7: #{tpu_custom_call.1} parent=1 // pred_check_branch
      %12 = sbr.rel (0) target = $region9
    $region8: #{tpu_custom_call.1} parent=1 // pred_region
      %s14 = ssub.s32 1024, 1024
      %15 = vsyncadd [#allocation3], %s14
      %s16 = sshll.u32 [#allocation2], 4
      %s17 = int_to_ptr.vmem [resolvable:$true] %s16
      %22 = dma.hbm_to_vmem [thread:$0]  %s1, 1024, %s17, [#allocation3], 128, 128, 8
    $region9: #{tpu_custom_call.1} parent=1 // pred_fallthru
      _
    // Predicated region
    $region10: #{tpu_custom_call.1} parent=1 // pred_check
      _
    $region11: #{tpu_custom_call.1} parent=1 // pred_check_branch
      %24 = sbr.rel (0) target = $region13
    $region12: #{tpu_custom_call.1} parent=1 // pred_region
      %25 = dma.done [#allocation3], 1024
    $region13: #{tpu_custom_call.1} parent=1 // pred_fallthru
      _
    %v26 = vld [vmem:[%s0] sm:$0xff]
    %v27 = vld [vmem:[%s0 + $0x8] sm:$0xff]
    %v28 = vlaneseq
    %v29 = vand.u32 %v28, 127
    %30 = vset.pattern.permute.xlu0 0
    %31 = vperm.xlu0 %30, %v26
    %v32 = vpop.permute.xlu0 %31
    %33 = vset.pattern.permute.xlu0 0
    %34 = vperm.xlu0 %33, %v27
    %v35 = vpop.permute.xlu0 %34
    %vm36 = vcmp.eq.s32.totalorder %v32, %v29
    %vm37 = vcmp.eq.s32.totalorder %v35, %v29
    %v38 = vsel %vm36, 1, 0
    %v39 = vsel %vm37, 1, 0
    %v40 = vcvt.s32.f32 %v38
    %v41 = vcvt.s32.f32 %v39
    %v42 = vld [vmem:[#allocation2] sm:$0xff]
    %v43 = vld [vmem:[#allocation2 + $0x8] sm:$0xff]
    %v44 = vld [vmem:[#allocation2 + $0x10] sm:$0xff]
    %v45 = vld [vmem:[#allocation2 + $0x18] sm:$0xff]
    %v46 = vld [vmem:[#allocation2 + $0x20] sm:$0xff]
    %v47 = vld [vmem:[#allocation2 + $0x28] sm:$0xff]
    %v48 = vld [vmem:[#allocation2 + $0x30] sm:$0xff]
    %v49 = vld [vmem:[#allocation2 + $0x38] sm:$0xff]
    %vm50 = vcmask 523264
    %v52 = vsel %vm50, %v40, 0
    %v55 = vsel %vm50, %v41, 0
    %57 = vmatprep.subr.mxu0 0.0
    %v58 = vand.u32 %v42, 4294901760
    %59 = vmatpush1.msra.mxu0 %v58
    %60 = vmatprep.subr.mxu0 0.0
    %v61 = vand.u32 %v43, 4294901760
    %62 = vmatpush1.msra.mxu0 %v61
    %63 = vmatprep.subr.mxu0 0.0
    %v64 = vand.u32 %v44, 4294901760
    %65 = vmatpush1.msra.mxu0 %v64
    %66 = vmatprep.subr.mxu0 0.0
    %v67 = vand.u32 %v45, 4294901760
    %68 = vmatpush1.msra.mxu0 %v67
    %69 = vmatprep.subr.mxu0 0.0
    %v70 = vand.u32 %v46, 4294901760
    %71 = vmatpush1.msra.mxu0 %v70
    %72 = vmatprep.subr.mxu0 0.0
    %v73 = vand.u32 %v47, 4294901760
    %74 = vmatpush1.msra.mxu0 %v73
    %75 = vmatprep.subr.mxu0 0.0
    %v76 = vand.u32 %v48, 4294901760
    %77 = vmatpush1.msra.mxu0 %v76
    %78 = vmatprep.subr.mxu0 0.0
    %v79 = vand.u32 %v49, 4294901760
    %80 = vmatpush1.msra.mxu0 %v79
    %81 = vmatprep.subr.mxu0 0.0
    %82 = vmatpush1.msra.mxu0 0.0
    %83 = vmatprep.subr.mxu0 0.0
    %84 = vmatpush1.msra.mxu0 0.0
    %85 = vmatprep.subr.mxu0 0.0
    %86 = vmatpush1.msra.mxu0 0.0
    %87 = vmatprep.subr.mxu0 0.0
    %88 = vmatpush1.msra.mxu0 0.0
    %89 = vmatprep.subr.mxu0 0.0
    %90 = vmatpush1.msra.mxu0 0.0
    %91 = vmatprep.subr.mxu0 0.0
    %92 = vmatpush1.msra.mxu0 0.0
    %93 = vmatprep.subr.mxu0 0.0
    %94 = vmatpush1.msra.mxu0 0.0
    %95 = vmatprep.subr.mxu0 0.0
    %96 = vmatpush1.msra.mxu0 0.0
    %97 = vmatprep.subr.mxu0 0.0
    %98 = vmatpush1.msra.mxu0 0.0
    %99 = vmatprep.subr.mxu0 0.0
    %100 = vmatpush1.msra.mxu0 0.0
    %101 = vmatprep.subr.mxu0 0.0
    %102 = vmatpush1.msra.mxu0 0.0
    %103 = vmatprep.subr.mxu0 0.0
    %104 = vmatpush1.msra.mxu0 0.0
    %105 = vmatprep.subr.mxu0 0.0
    %106 = vmatpush1.msra.mxu0 0.0
    %107 = vmatprep.subr.mxu0 0.0
    %108 = vmatpush1.msra.mxu0 0.0
    %109 = vmatprep.subr.mxu0 0.0
    %110 = vmatpush1.msra.mxu0 0.0
    %111 = vmatprep.subr.mxu0 0.0
    %112 = vmatpush1.msra.mxu0 0.0
    %113 = vmatprep.subr.mxu0 0.0
    %114 = vmatpush1.msra.mxu0 0.0
    %115 = vmatprep.subr.mxu0 0.0
    %116 = vmatpush1.msra.mxu0 0.0
    %117 = vmatprep.subr.mxu0 0.0
    %118 = vmatpush1.msra.mxu0 0.0
    %119 = vmatprep.subr.mxu0 0.0
    %120 = vmatpush1.msra.mxu0 0.0
    %121 = vmatprep.subr.mxu0 0.0
    %122 = vmatpush1.msra.mxu0 0.0
    %123 = vmatprep.subr.mxu0 0.0
    %124 = vmatpush1.msra.mxu0 0.0
    %125 = vmatprep.subr.mxu0 0.0
    %126 = vmatpush1.msra.mxu0 0.0
    %127 = vmatprep.subr.mxu0 0.0
    %128 = vmatpush1.msra.mxu0 0.0
    %129 = vmatprep.mubr.f32.mxu0 0.0
    %v130 = vand.u32 %v52, 4294901760
    %v131 = vsub.f32 %v52, %v130
    %v132 = vand.u32 %v131, 4294901760
    %v133 = vsub.f32 %v131, %v132
    %v134 = vand.u32 %v133, 4294901760
    %135 = vmatmul.mubr.f32.gmra.mrb[0].mxu0 %v134
    %v136 = vpop.f32.mrb[0].mxu0
    %v137 = vadd.f32 0.0, %v136
    %v138 = vpop.f32.mrb[0].mxu0
    %139 = vmatprep.mubr.f32.mxu0 0.0
    %v140 = vand.u32 %v55, 4294901760
    %v141 = vsub.f32 %v55, %v140
    %v142 = vand.u32 %v141, 4294901760
    %v143 = vsub.f32 %v141, %v142
    %v144 = vand.u32 %v143, 4294901760
    %145 = vmatmul.mubr.f32.gmra.mrb[0].mxu0 %v144
    %v146 = vpop.f32.mrb[0].mxu0
    %v147 = vadd.f32 0.0, %v146
    %v148 = vpop.f32.mrb[0].mxu0
    %149 = vdwg.mxu0
    %150 = vmatprep.subr.mxu0 0.0
    %v151 = vand.u32 %v42, 4294901760
    %v152 = vsub.f32 %v42, %v151
    %v153 = vand.u32 %v152, 4294901760
    %v154 = vsub.f32 %v152, %v153
    %v155 = vand.u32 %v154, 4294901760
    %156 = vmatpush1.msra.mxu0 %v155
    %157 = vmatprep.subr.mxu0 0.0
    %v158 = vand.u32 %v43, 4294901760
    %v159 = vsub.f32 %v43, %v158
    %v160 = vand.u32 %v159, 4294901760
    %v161 = vsub.f32 %v159, %v160
    %v162 = vand.u32 %v161, 4294901760
    %163 = vmatpush1.msra.mxu0 %v162
    %164 = vmatprep.subr.mxu0 0.0
    %v165 = vand.u32 %v44, 4294901760
    %v166 = vsub.f32 %v44, %v165
    %v167 = vand.u32 %v166, 4294901760
    %v168 = vsub.f32 %v166, %v167
    %v169 = vand.u32 %v168, 4294901760
    %170 = vmatpush1.msra.mxu0 %v169
    %171 = vmatprep.subr.mxu0 0.0
    %v172 = vand.u32 %v45, 4294901760
    %v173 = vsub.f32 %v45, %v172
    %v174 = vand.u32 %v173, 4294901760
    %v175 = vsub.f32 %v173, %v174
    %v176 = vand.u32 %v175, 4294901760
    %177 = vmatpush1.msra.mxu0 %v176
    %178 = vmatprep.subr.mxu0 0.0
    %v179 = vand.u32 %v46, 4294901760
    %v180 = vsub.f32 %v46, %v179
    %v181 = vand.u32 %v180, 4294901760
    %v182 = vsub.f32 %v180, %v181
    %v183 = vand.u32 %v182, 4294901760
    %184 = vmatpush1.msra.mxu0 %v183
    %185 = vmatprep.subr.mxu0 0.0
    %v186 = vand.u32 %v47, 4294901760
    %v187 = vsub.f32 %v47, %v186
    %v188 = vand.u32 %v187, 4294901760
    %v189 = vsub.f32 %v187, %v188
    %v190 = vand.u32 %v189, 4294901760
    %191 = vmatpush1.msra.mxu0 %v190
    %192 = vmatprep.subr.mxu0 0.0
    %v193 = vand.u32 %v48, 4294901760
    %v194 = vsub.f32 %v48, %v193
    %v195 = vand.u32 %v194, 4294901760
    %v196 = vsub.f32 %v194, %v195
    %v197 = vand.u32 %v196, 4294901760
    %198 = vmatpush1.msra.mxu0 %v197
    %199 = vmatprep.subr.mxu0 0.0
    %v200 = vand.u32 %v49, 4294901760
    %v201 = vsub.f32 %v49, %v200
    %v202 = vand.u32 %v201, 4294901760
    %v203 = vsub.f32 %v201, %v202
    %v204 = vand.u32 %v203, 4294901760
    %205 = vmatpush1.msra.mxu0 %v204
    %206 = vmatprep.subr.mxu0 0.0
    %207 = vmatpush1.msra.mxu0 0.0
    %208 = vmatprep.subr.mxu0 0.0
    %209 = vmatpush1.msra.mxu0 0.0
    %210 = vmatprep.subr.mxu0 0.0
    %211 = vmatpush1.msra.mxu0 0.0
    %212 = vmatprep.subr.mxu0 0.0
    %213 = vmatpush1.msra.mxu0 0.0
    %214 = vmatprep.subr.mxu0 0.0
    %215 = vmatpush1.msra.mxu0 0.0
    %216 = vmatprep.subr.mxu0 0.0
    %217 = vmatpush1.msra.mxu0 0.0
    %218 = vmatprep.subr.mxu0 0.0
    %219 = vmatpush1.msra.mxu0 0.0
    %220 = vmatprep.subr.mxu0 0.0
    %221 = vmatpush1.msra.mxu0 0.0
    %222 = vmatprep.subr.mxu0 0.0
    %223 = vmatpush1.msra.mxu0 0.0
    %224 = vmatprep.subr.mxu0 0.0
    %225 = vmatpush1.msra.mxu0 0.0
    %226 = vmatprep.subr.mxu0 0.0
    %227 = vmatpush1.msra.mxu0 0.0
    %228 = vmatprep.subr.mxu0 0.0
    %229 = vmatpush1.msra.mxu0 0.0
    %230 = vmatprep.subr.mxu0 0.0
    %231 = vmatpush1.msra.mxu0 0.0
    %232 = vmatprep.subr.mxu0 0.0
    %233 = vmatpush1.msra.mxu0 0.0
    %234 = vmatprep.subr.mxu0 0.0
    %235 = vmatpush1.msra.mxu0 0.0
    %236 = vmatprep.subr.mxu0 0.0
    %237 = vmatpush1.msra.mxu0 0.0
    %238 = vmatprep.subr.mxu0 0.0
    %239 = vmatpush1.msra.mxu0 0.0
    %240 = vmatprep.subr.mxu0 0.0
    %241 = vmatpush1.msra.mxu0 0.0
    %242 = vmatprep.subr.mxu0 0.0
    %243 = vmatpush1.msra.mxu0 0.0
    %244 = vmatprep.subr.mxu0 0.0
    %245 = vmatpush1.msra.mxu0 0.0
    %246 = vmatprep.subr.mxu0 0.0
    %247 = vmatpush1.msra.mxu0 0.0
    %248 = vmatprep.subr.mxu0 0.0
    %249 = vmatpush1.msra.mxu0 0.0
    %250 = vmatprep.subr.mxu0 0.0
    %251 = vmatpush1.msra.mxu0 0.0
    %252 = vmatprep.subr.mxu0 0.0
    %253 = vmatpush1.msra.mxu0 0.0
    %254 = vmatprep.mubr.f32.mxu0 0.0
    %v255 = vand.u32 %v52, 4294901760
    %256 = vmatmul.mubr.f32.gmra.mrb[0].mxu0 %v255
    %v257 = vpop.f32.mrb[0].mxu0
    %v258 = vadd.f32 %v137, %v257
    %v259 = vpop.f32.mrb[0].mxu0
    %260 = vmatprep.mubr.f32.mxu0 0.0
    %v261 = vand.u32 %v55, 4294901760
    %262 = vmatmul.mubr.f32.gmra.mrb[0].mxu0 %v261
    %v263 = vpop.f32.mrb[0].mxu0
    %v264 = vadd.f32 %v147, %v263
    %v265 = vpop.f32.mrb[0].mxu0
    %266 = vdwg.mxu0
    %267 = vmatprep.subr.mxu0 0.0
    %v268 = vand.u32 %v42, 4294901760
    %v269 = vsub.f32 %v42, %v268
    %270 = vmatpush1.msra.mxu0 %v269
    %271 = vmatprep.subr.mxu0 0.0
    %v272 = vand.u32 %v43, 4294901760
    %v273 = vsub.f32 %v43, %v272
    %274 = vmatpush1.msra.mxu0 %v273
    %275 = vmatprep.subr.mxu0 0.0
    %v276 = vand.u32 %v44, 4294901760
    %v277 = vsub.f32 %v44, %v276
    %278 = vmatpush1.msra.mxu0 %v277
    %279 = vmatprep.subr.mxu0 0.0
    %v280 = vand.u32 %v45, 4294901760
    %v281 = vsub.f32 %v45, %v280
    %282 = vmatpush1.msra.mxu0 %v281
    %283 = vmatprep.subr.mxu0 0.0
    %v284 = vand.u32 %v46, 4294901760
    %v285 = vsub.f32 %v46, %v284
    %286 = vmatpush1.msra.mxu0 %v285
    %287 = vmatprep.subr.mxu0 0.0
    %v288 = vand.u32 %v47, 4294901760
    %v289 = vsub.f32 %v47, %v288
    %290 = vmatpush1.msra.mxu0 %v289
    %291 = vmatprep.subr.mxu0 0.0
    %v292 = vand.u32 %v48, 4294901760
    %v293 = vsub.f32 %v48, %v292
    %294 = vmatpush1.msra.mxu0 %v293
    %295 = vmatprep.subr.mxu0 0.0
    %v296 = vand.u32 %v49, 4294901760
    %v297 = vsub.f32 %v49, %v296
    %298 = vmatpush1.msra.mxu0 %v297
    %299 = vmatprep.subr.mxu0 0.0
    %300 = vmatpush1.msra.mxu0 0.0
    %301 = vmatprep.subr.mxu0 0.0
    %302 = vmatpush1.msra.mxu0 0.0
    %303 = vmatprep.subr.mxu0 0.0
    %304 = vmatpush1.msra.mxu0 0.0
    %305 = vmatprep.subr.mxu0 0.0
    %306 = vmatpush1.msra.mxu0 0.0
    %307 = vmatprep.subr.mxu0 0.0
    %308 = vmatpush1.msra.mxu0 0.0
    %309 = vmatprep.subr.mxu0 0.0
    %310 = vmatpush1.msra.mxu0 0.0
    %311 = vmatprep.subr.mxu0 0.0
    %312 = vmatpush1.msra.mxu0 0.0
    %313 = vmatprep.subr.mxu0 0.0
    %314 = vmatpush1.msra.mxu0 0.0
    %315 = vmatprep.subr.mxu0 0.0
    %316 = vmatpush1.msra.mxu0 0.0
    %317 = vmatprep.subr.mxu0 0.0
    %318 = vmatpush1.msra.mxu0 0.0
    %319 = vmatprep.subr.mxu0 0.0
    %320 = vmatpush1.msra.mxu0 0.0
    %321 = vmatprep.subr.mxu0 0.0
    %322 = vmatpush1.msra.mxu0 0.0
    %323 = vmatprep.subr.mxu0 0.0
    %324 = vmatpush1.msra.mxu0 0.0
    %325 = vmatprep.subr.mxu0 0.0
    %326 = vmatpush1.msra.mxu0 0.0
    %327 = vmatprep.subr.mxu0 0.0
    %328 = vmatpush1.msra.mxu0 0.0
    %329 = vmatprep.subr.mxu0 0.0
    %330 = vmatpush1.msra.mxu0 0.0
    %331 = vmatprep.subr.mxu0 0.0
    %332 = vmatpush1.msra.mxu0 0.0
    %333 = vmatprep.subr.mxu0 0.0
    %334 = vmatpush1.msra.mxu0 0.0
    %335 = vmatprep.subr.mxu0 0.0
    %336 = vmatpush1.msra.mxu0 0.0
    %337 = vmatprep.subr.mxu0 0.0
    %338 = vmatpush1.msra.mxu0 0.0
    %339 = vmatprep.subr.mxu0 0.0
    %340 = vmatpush1.msra.mxu0 0.0
    %341 = vmatprep.subr.mxu0 0.0
    %342 = vmatpush1.msra.mxu0 0.0
    %343 = vmatprep.subr.mxu0 0.0
    %344 = vmatpush1.msra.mxu0 0.0
    %345 = vmatprep.subr.mxu0 0.0
    %346 = vmatpush1.msra.mxu0 0.0
    %347 = vmatprep.mubr.f32.mxu0 0.0
    %v348 = vand.u32 %v52, 4294901760
    %v349 = vsub.f32 %v52, %v348
    %350 = vmatmul.mubr.f32.gmra.mrb[0].mxu0 %v349
    %v351 = vpop.f32.mrb[0].mxu0
    %v352 = vadd.f32 %v258, %v351
    %v353 = vpop.f32.mrb[0].mxu0
    %354 = vmatprep.mubr.f32.mxu0 0.0
    %v355 = vand.u32 %v55, 4294901760
    %v356 = vsub.f32 %v55, %v355
    %357 = vmatmul.mubr.f32.gmra.mrb[0].mxu0 %v356
    %v358 = vpop.f32.mrb[0].mxu0
    %v359 = vadd.f32 %v264, %v358
    %v360 = vpop.f32.mrb[0].mxu0
    %361 = vdwg.mxu0
    %362 = vmatprep.subr.mxu0 0.0
    %v363 = vand.u32 %v42, 4294901760
    %364 = vmatpush1.msra.mxu0 %v363
    %365 = vmatprep.subr.mxu0 0.0
    %v366 = vand.u32 %v43, 4294901760
    %367 = vmatpush1.msra.mxu0 %v366
    %368 = vmatprep.subr.mxu0 0.0
    %v369 = vand.u32 %v44, 4294901760
    %370 = vmatpush1.msra.mxu0 %v369
    %371 = vmatprep.subr.mxu0 0.0
    %v372 = vand.u32 %v45, 4294901760
    %373 = vmatpush1.msra.mxu0 %v372
    %374 = vmatprep.subr.mxu0 0.0
    %v375 = vand.u32 %v46, 4294901760
    %376 = vmatpush1.msra.mxu0 %v375
    %377 = vmatprep.subr.mxu0 0.0
    %v378 = vand.u32 %v47, 4294901760
    %379 = vmatpush1.msra.mxu0 %v378
    %380 = vmatprep.subr.mxu0 0.0
    %v381 = vand.u32 %v48, 4294901760
    %382 = vmatpush1.msra.mxu0 %v381
    %383 = vmatprep.subr.mxu0 0.0
    %v384 = vand.u32 %v49, 4294901760
    %385 = vmatpush1.msra.mxu0 %v384
    %386 = vmatprep.subr.mxu0 0.0
    %387 = vmatpush1.msra.mxu0 0.0
    %388 = vmatprep.subr.mxu0 0.0
    %389 = vmatpush1.msra.mxu0 0.0
    %390 = vmatprep.subr.mxu0 0.0
    %391 = vmatpush1.msra.mxu0 0.0
    %392 = vmatprep.subr.mxu0 0.0
    %393 = vmatpush1.msra.mxu0 0.0
    %394 = vmatprep.subr.mxu0 0.0
    %395 = vmatpush1.msra.mxu0 0.0
    %396 = vmatprep.subr.mxu0 0.0
    %397 = vmatpush1.msra.mxu0 0.0
    %398 = vmatprep.subr.mxu0 0.0
    %399 = vmatpush1.msra.mxu0 0.0
    %400 = vmatprep.subr.mxu0 0.0
    %401 = vmatpush1.msra.mxu0 0.0
    %402 = vmatprep.subr.mxu0 0.0
    %403 = vmatpush1.msra.mxu0 0.0
    %404 = vmatprep.subr.mxu0 0.0
    %405 = vmatpush1.msra.mxu0 0.0
    %406 = vmatprep.subr.mxu0 0.0
    %407 = vmatpush1.msra.mxu0 0.0
    %408 = vmatprep.subr.mxu0 0.0
    %409 = vmatpush1.msra.mxu0 0.0
    %410 = vmatprep.subr.mxu0 0.0
    %411 = vmatpush1.msra.mxu0 0.0
    %412 = vmatprep.subr.mxu0 0.0
    %413 = vmatpush1.msra.mxu0 0.0
    %414 = vmatprep.subr.mxu0 0.0
    %415 = vmatpush1.msra.mxu0 0.0
    %416 = vmatprep.subr.mxu0 0.0
    %417 = vmatpush1.msra.mxu0 0.0
    %418 = vmatprep.subr.mxu0 0.0
    %419 = vmatpush1.msra.mxu0 0.0
    %420 = vmatprep.subr.mxu0 0.0
    %421 = vmatpush1.msra.mxu0 0.0
    %422 = vmatprep.subr.mxu0 0.0
    %423 = vmatpush1.msra.mxu0 0.0
    %424 = vmatprep.subr.mxu0 0.0
    %425 = vmatpush1.msra.mxu0 0.0
    %426 = vmatprep.subr.mxu0 0.0
    %427 = vmatpush1.msra.mxu0 0.0
    %428 = vmatprep.subr.mxu0 0.0
    %429 = vmatpush1.msra.mxu0 0.0
    %430 = vmatprep.subr.mxu0 0.0
    %431 = vmatpush1.msra.mxu0 0.0
    %432 = vmatprep.subr.mxu0 0.0
    %433 = vmatpush1.msra.mxu0 0.0
    %434 = vmatprep.mubr.f32.mxu0 0.0
    %v435 = vand.u32 %v52, 4294901760
    %v436 = vsub.f32 %v52, %v435
    %v437 = vand.u32 %v436, 4294901760
    %438 = vmatmul.mubr.f32.gmra.mrb[0].mxu0 %v437
    %v439 = vpop.f32.mrb[0].mxu0
    %v440 = vadd.f32 %v352, %v439
    %v441 = vpop.f32.mrb[0].mxu0
    %442 = vmatprep.mubr.f32.mxu0 0.0
    %v443 = vand.u32 %v55, 4294901760
    %v444 = vsub.f32 %v55, %v443
    %v445 = vand.u32 %v444, 4294901760
    %446 = vmatmul.mubr.f32.gmra.mrb[0].mxu0 %v445
    %v447 = vpop.f32.mrb[0].mxu0
    %v448 = vadd.f32 %v359, %v447
    %v449 = vpop.f32.mrb[0].mxu0
    %450 = vdwg.mxu0
    %451 = vmatprep.subr.mxu0 0.0
    %v452 = vand.u32 %v42, 4294901760
    %v453 = vsub.f32 %v42, %v452
    %v454 = vand.u32 %v453, 4294901760
    %455 = vmatpush1.msra.mxu0 %v454
    %456 = vmatprep.subr.mxu0 0.0
    %v457 = vand.u32 %v43, 4294901760
    %v458 = vsub.f32 %v43, %v457
    %v459 = vand.u32 %v458, 4294901760
    %460 = vmatpush1.msra.mxu0 %v459
    %461 = vmatprep.subr.mxu0 0.0
    %v462 = vand.u32 %v44, 4294901760
    %v463 = vsub.f32 %v44, %v462
    %v464 = vand.u32 %v463, 4294901760
    %465 = vmatpush1.msra.mxu0 %v464
    %466 = vmatprep.subr.mxu0 0.0
    %v467 = vand.u32 %v45, 4294901760
    %v468 = vsub.f32 %v45, %v467
    %v469 = vand.u32 %v468, 4294901760
    %470 = vmatpush1.msra.mxu0 %v469
    %471 = vmatprep.subr.mxu0 0.0
    %v472 = vand.u32 %v46, 4294901760
    %v473 = vsub.f32 %v46, %v472
    %v474 = vand.u32 %v473, 4294901760
    %475 = vmatpush1.msra.mxu0 %v474
    %476 = vmatprep.subr.mxu0 0.0
    %v477 = vand.u32 %v47, 4294901760
    %v478 = vsub.f32 %v47, %v477
    %v479 = vand.u32 %v478, 4294901760
    %480 = vmatpush1.msra.mxu0 %v479
    %481 = vmatprep.subr.mxu0 0.0
    %v482 = vand.u32 %v48, 4294901760
    %v483 = vsub.f32 %v48, %v482
    %v484 = vand.u32 %v483, 4294901760
    %485 = vmatpush1.msra.mxu0 %v484
    %486 = vmatprep.subr.mxu0 0.0
    %v487 = vand.u32 %v49, 4294901760
    %v488 = vsub.f32 %v49, %v487
    %v489 = vand.u32 %v488, 4294901760
    %490 = vmatpush1.msra.mxu0 %v489
    %491 = vmatprep.subr.mxu0 0.0
    %492 = vmatpush1.msra.mxu0 0.0
    %493 = vmatprep.subr.mxu0 0.0
    %494 = vmatpush1.msra.mxu0 0.0
    %495 = vmatprep.subr.mxu0 0.0
    %496 = vmatpush1.msra.mxu0 0.0
    %497 = vmatprep.subr.mxu0 0.0
    %498 = vmatpush1.msra.mxu0 0.0
    %499 = vmatprep.subr.mxu0 0.0
    %500 = vmatpush1.msra.mxu0 0.0
    %501 = vmatprep.subr.mxu0 0.0
    %502 = vmatpush1.msra.mxu0 0.0
    %503 = vmatprep.subr.mxu0 0.0
    %504 = vmatpush1.msra.mxu0 0.0
    %505 = vmatprep.subr.mxu0 0.0
    %506 = vmatpush1.msra.mxu0 0.0
    %507 = vmatprep.subr.mxu0 0.0
    %508 = vmatpush1.msra.mxu0 0.0
    %509 = vmatprep.subr.mxu0 0.0
    %510 = vmatpush1.msra.mxu0 0.0
    %511 = vmatprep.subr.mxu0 0.0
    %512 = vmatpush1.msra.mxu0 0.0
    %513 = vmatprep.subr.mxu0 0.0
    %514 = vmatpush1.msra.mxu0 0.0
    %515 = vmatprep.subr.mxu0 0.0
    %516 = vmatpush1.msra.mxu0 0.0
    %517 = vmatprep.subr.mxu0 0.0
    %518 = vmatpush1.msra.mxu0 0.0
    %519 = vmatprep.subr.mxu0 0.0
    %520 = vmatpush1.msra.mxu0 0.0
    %521 = vmatprep.subr.mxu0 0.0
    %522 = vmatpush1.msra.mxu0 0.0
    %523 = vmatprep.subr.mxu0 0.0
    %524 = vmatpush1.msra.mxu0 0.0
    %525 = vmatprep.subr.mxu0 0.0
    %526 = vmatpush1.msra.mxu0 0.0
    %527 = vmatprep.subr.mxu0 0.0
    %528 = vmatpush1.msra.mxu0 0.0
    %529 = vmatprep.subr.mxu0 0.0
    %530 = vmatpush1.msra.mxu0 0.0
    %531 = vmatprep.subr.mxu0 0.0
    %532 = vmatpush1.msra.mxu0 0.0
    %533 = vmatprep.subr.mxu0 0.0
    %534 = vmatpush1.msra.mxu0 0.0
    %535 = vmatprep.subr.mxu0 0.0
    %536 = vmatpush1.msra.mxu0 0.0
    %537 = vmatprep.subr.mxu0 0.0
    %538 = vmatpush1.msra.mxu0 0.0
    %539 = vmatprep.mubr.f32.mxu0 0.0
    %v540 = vand.u32 %v52, 4294901760
    %541 = vmatmul.mubr.f32.gmra.mrb[0].mxu0 %v540
    %v542 = vpop.f32.mrb[0].mxu0
    %v543 = vadd.f32 %v440, %v542
    %v544 = vpop.f32.mrb[0].mxu0
    %545 = vmatprep.mubr.f32.mxu0 0.0
    %v546 = vand.u32 %v55, 4294901760
    %547 = vmatmul.mubr.f32.gmra.mrb[0].mxu0 %v546
    %v548 = vpop.f32.mrb[0].mxu0
    %v549 = vadd.f32 %v448, %v548
    %v550 = vpop.f32.mrb[0].mxu0
    %551 = vdwg.mxu0
    %552 = vmatprep.subr.mxu0 0.0
    %v553 = vand.u32 %v42, 4294901760
    %554 = vmatpush1.msra.mxu0 %v553
    %555 = vmatprep.subr.mxu0 0.0
    %v556 = vand.u32 %v43, 4294901760
    %557 = vmatpush1.msra.mxu0 %v556
    %558 = vmatprep.subr.mxu0 0.0
    %v559 = vand.u32 %v44, 4294901760
    %560 = vmatpush1.msra.mxu0 %v559
    %561 = vmatprep.subr.mxu0 0.0
    %v562 = vand.u32 %v45, 4294901760
    %563 = vmatpush1.msra.mxu0 %v562
    %564 = vmatprep.subr.mxu0 0.0
    %v565 = vand.u32 %v46, 4294901760
    %566 = vmatpush1.msra.mxu0 %v565
    %567 = vmatprep.subr.mxu0 0.0
    %v568 = vand.u32 %v47, 4294901760
    %569 = vmatpush1.msra.mxu0 %v568
    %570 = vmatprep.subr.mxu0 0.0
    %v571 = vand.u32 %v48, 4294901760
    %572 = vmatpush1.msra.mxu0 %v571
    %573 = vmatprep.subr.mxu0 0.0
    %v574 = vand.u32 %v49, 4294901760
    %575 = vmatpush1.msra.mxu0 %v574
    %576 = vmatprep.subr.mxu0 0.0
    %577 = vmatpush1.msra.mxu0 0.0
    %578 = vmatprep.subr.mxu0 0.0
    %579 = vmatpush1.msra.mxu0 0.0
    %580 = vmatprep.subr.mxu0 0.0
    %581 = vmatpush1.msra.mxu0 0.0
    %582 = vmatprep.subr.mxu0 0.0
    %583 = vmatpush1.msra.mxu0 0.0
    %584 = vmatprep.subr.mxu0 0.0
    %585 = vmatpush1.msra.mxu0 0.0
    %586 = vmatprep.subr.mxu0 0.0
    %587 = vmatpush1.msra.mxu0 0.0
    %588 = vmatprep.subr.mxu0 0.0
    %589 = vmatpush1.msra.mxu0 0.0
    %590 = vmatprep.subr.mxu0 0.0
    %591 = vmatpush1.msra.mxu0 0.0
    %592 = vmatprep.subr.mxu0 0.0
    %593 = vmatpush1.msra.mxu0 0.0
    %594 = vmatprep.subr.mxu0 0.0
    %595 = vmatpush1.msra.mxu0 0.0
    %596 = vmatprep.subr.mxu0 0.0
    %597 = vmatpush1.msra.mxu0 0.0
    %598 = vmatprep.subr.mxu0 0.0
    %599 = vmatpush1.msra.mxu0 0.0
    %600 = vmatprep.subr.mxu0 0.0
    %601 = vmatpush1.msra.mxu0 0.0
    %602 = vmatprep.subr.mxu0 0.0
    %603 = vmatpush1.msra.mxu0 0.0
    %604 = vmatprep.subr.mxu0 0.0
    %605 = vmatpush1.msra.mxu0 0.0
    %606 = vmatprep.subr.mxu0 0.0
    %607 = vmatpush1.msra.mxu0 0.0
    %608 = vmatprep.subr.mxu0 0.0
    %609 = vmatpush1.msra.mxu0 0.0
    %610 = vmatprep.subr.mxu0 0.0
    %611 = vmatpush1.msra.mxu0 0.0
    %612 = vmatprep.subr.mxu0 0.0
    %613 = vmatpush1.msra.mxu0 0.0
    %614 = vmatprep.subr.mxu0 0.0
    %615 = vmatpush1.msra.mxu0 0.0
    %616 = vmatprep.subr.mxu0 0.0
    %617 = vmatpush1.msra.mxu0 0.0
    %618 = vmatprep.subr.mxu0 0.0
    %619 = vmatpush1.msra.mxu0 0.0
    %620 = vmatprep.subr.mxu0 0.0
    %621 = vmatpush1.msra.mxu0 0.0
    %622 = vmatprep.subr.mxu0 0.0
    %623 = vmatpush1.msra.mxu0 0.0
    %624 = vmatprep.mubr.f32.mxu0 0.0
    %v625 = vand.u32 %v52, 4294901760
    %626 = vmatmul.mubr.f32.gmra.mrb[0].mxu0 %v625
    %v627 = vpop.f32.mrb[0].mxu0
    %v628 = vadd.f32 %v543, %v627
    %v629 = vpop.f32.mrb[0].mxu0
    %630 = vmatprep.mubr.f32.mxu0 0.0
    %v631 = vand.u32 %v55, 4294901760
    %632 = vmatmul.mubr.f32.gmra.mrb[0].mxu0 %v631
    %v633 = vpop.f32.mrb[0].mxu0
    %v634 = vadd.f32 %v549, %v633
    %v635 = vpop.f32.mrb[0].mxu0
    %636 = vdwg.mxu0
    %637 = vst [vmem:[#allocation5] sm:$0xff] %v628
    %638 = vst [vmem:[#allocation5 + $0x8] sm:$0xff] %v634
    // Predicated region
    $region14: #{tpu_custom_call.1} parent=1 // pred_check
      _
    $region15: #{tpu_custom_call.1} parent=1 // pred_check_branch
      %640 = sbr.rel (0) target = $region17
    $region16: #{tpu_custom_call.1} parent=1 // pred_region
      %s642 = ssub.s32 256, 256
      %643 = vsyncadd [#allocation4], %s642
      %s644 = sshll.u32 [#allocation5], 4
      %s645 = int_to_ptr.vmem [resolvable:$true] %s644
      %650 = dma.vmem_to_hbm [thread:$0]  %s645, 256, %s2, [#allocation4], 128, 128, 8
    $region17: #{tpu_custom_call.1} parent=1 // pred_fallthru
      _
    // Predicated region
    $region18: #{tpu_custom_call.1} parent=1 // pred_check
      _
    $region19: #{tpu_custom_call.1} parent=1 // pred_check_branch
      %652 = sbr.rel (0) target = $region21
    $region20: #{tpu_custom_call.1} parent=1 // pred_region
      %653 = dma.done [#allocation4], 256
    $region21: #{tpu_custom_call.1} parent=1 // pred_fallthru
      _
    %654 = vsyncpa [#allocation3], 1
    %655 = vsyncpa [#allocation4], 1

</llo_original>
